<compile_context>
chip_gen: v7x
topology: tpu7x:2x2x1
jax: 0.10.0
libtpu: 0.0.40
codegen_flags: <defaults>
</compile_context>

<pallas_src>
import functools

import jax
import jax.numpy as jnp
from jax.experimental import pallas as pl
from jax.experimental.pallas import tpu as pltpu

LATENT_DIM = 100
IN_DIM = 28 * 28   # 784
HID_DIM = 128


def _round_up(x, m):
    return (x + m - 1) // m * m


def _cdiv(a, b):
    return -(-a // b)


def autoencoder_kernel(x_ref,
                       w1_ref, b1_ref,
                       w23_ref, b23_ref,
                       w4_ref, b4_ref,
                       out_ref):
    """One batch tile of the fused autoencoder MLP.

    x_ref:  (TB, 784) f32 (cast to the weight dtype in-kernel)
    w1:     (784, 128) cdt    b1:  (1, 128) f32
    w23:    (128, 128) cdt    b23: (1, 128) f32   (pre-fused W2 @ W3)
    w4:     (128, 784) cdt    b4:  (1, 784) f32
    out:    (TB, 784) out_dtype
    """
    cdt = w1_ref.dtype
    # In-kernel cast: x crosses HBM exactly once as f32; the MXU operands are
    # bf16 (default) or f32.  Accumulation and activations stay in f32.
    x = x_ref[...].astype(cdt)

    # encoder: Linear(784,128) + ReLU
    h1 = jnp.dot(x, w1_ref[...], preferred_element_type=jnp.float32) + b1_ref[...]
    h1 = jnp.maximum(h1, 0.0)

    # fused encoder-tail + decoder-head: Linear(128,100) ; Linear(100,128) + ReLU
    h2 = jnp.dot(h1.astype(cdt), w23_ref[...],
                 preferred_element_type=jnp.float32) + b23_ref[...]
    h2 = jnp.maximum(h2, 0.0)

    # decoder: Linear(128,784) + Sigmoid
    y = jnp.dot(h2.astype(cdt), w4_ref[...],
                preferred_element_type=jnp.float32) + b4_ref[...]
    out_ref[...] = jax.nn.sigmoid(y).astype(out_ref.dtype)


def _const_spec(shape):
    """Resident operand: constant index_map (DMA'd once, stays in VMEM).

    Requested single-buffered (pl.Buffered(1)) since it is never re-fetched;
    reclaims the second weight buffer's VMEM when TB is pushed to the ceiling.
    Falls back to the default pipelining on jax versions without pipeline_mode.
    """
    index_map = lambda i: (0,) * len(shape)
    try:
        return pl.BlockSpec(shape, index_map, pipeline_mode=pl.Buffered(1))
    except (TypeError, AttributeError):
        return pl.BlockSpec(shape, index_map)


def prepare_params(params, compute_dtype=jnp.bfloat16):
    """One-time weight prep, hoisted out of the forward path.

    Fuses the activation-free Linear(128,100);Linear(100,128) pair
    (exact for the forward pass):  h1 @ W2 @ W3 + (b2 @ W3 + b3),
    and casts the matmul operands to the compute dtype.  Biases stay f32.
    """
    w1, b1, w2, b2, w3, b3, w4, b4 = params
    w23 = w2 @ w3                       # (128, 128)
    b23 = b2 @ w3 + b3                  # (1, 128)
    cdt = jnp.dtype(compute_dtype)
    f32 = jnp.float32
    return (w1.astype(cdt), b1.astype(f32),
            w23.astype(cdt), b23.astype(f32),
            w4.astype(cdt), b4.astype(f32))


@functools.partial(jax.jit, static_argnames=("out_dtype", "block_b"))
def autoencoder_forward(x_nchw, prepared, *, out_dtype=jnp.float32, block_b=512):
    """x_nchw: (B, 1, 28, 28) -> (B, 1, 28, 28) in out_dtype (f32 default)."""
    B = x_nchw.shape[0]
    x_flat = x_nchw.reshape(B, IN_DIM).astype(jnp.float32)   # nn.Flatten()
    w1, b1, w23, b23, w4, b4 = prepared
    out_dt = jnp.dtype(out_dtype)

    # ---- batch tiling --------------------------------------------------
    # Large tiles (>=512 rows when B allows) amortize the ~0.35us/step
    # overhead; >=2 grid steps keep both v7x TensorCores busy; TB is a
    # multiple of 8 (sublane rule).  Ragged batches are padded and sliced.
    n_steps = max(1, _cdiv(B, block_b))
    if B >= 16:
        n_steps = max(n_steps, 2)
    TB = _round_up(_cdiv(B, n_steps), 8)
    B_pad = _round_up(B, TB)
    grid_b = B_pad // TB
    if B_pad != B:
        x_flat = jnp.pad(x_flat, ((0, B_pad - B), (0, 0)))

    # ---- VMEM budget / compiler params ---------------------------------
    w_itemsize = w1.dtype.itemsize
    weight_bytes = (w1.size + w23.size + w4.size) * w_itemsize \
        + (b1.size + b23.size + b4.size) * 4
    est_vmem = (2 * TB * IN_DIM * 4                     # x tile, 2 bufs, f32
                + 2 * TB * IN_DIM * out_dt.itemsize     # out tile, 2 bufs
                + 2 * weight_bytes)                     # weights (budget 2 bufs)
    cp_kwargs = dict(dimension_semantics=("parallel",))  # v7x: 2 TCs split grid
    if est_vmem > 12 * (1 << 20):
        # Raise the scoped-VMEM limit (v5e default 16 MiB) but stay well under
        # v7x's 64 MiB physical VMEM.
        cp_kwargs["vmem_limit_bytes"] = int(min(est_vmem + (4 << 20), 48 << 20))

    cost = pl.CostEstimate(
        flops=2 * B_pad * (IN_DIM * HID_DIM + HID_DIM * HID_DIM + HID_DIM * IN_DIM),
        transcendentals=B_pad * IN_DIM,                  # sigmoid exp
        bytes_accessed=B_pad * IN_DIM * (4 + out_dt.itemsize) + weight_bytes,
    )

    out = pl.pallas_call(
        autoencoder_kernel,
        out_shape=jax.ShapeDtypeStruct((B_pad, IN_DIM), out_dt),
        grid=(grid_b,),
        in_specs=[
            pl.BlockSpec((TB, IN_DIM), lambda i: (i, 0)),   # x tile (f32)
            _const_spec((IN_DIM, HID_DIM)),                 # w1
            _const_spec((1, HID_DIM)),                      # b1
            _const_spec((HID_DIM, HID_DIM)),                # w23
            _const_spec((1, HID_DIM)),                      # b23
            _const_spec((HID_DIM, IN_DIM)),                 # w4
            _const_spec((1, IN_DIM)),                       # b4
        ],
        out_specs=pl.BlockSpec((TB, IN_DIM), lambda i: (i, 0)),
        compiler_params=pltpu.CompilerParams(**cp_kwargs),
        cost_estimate=cost,
    )(x_flat, w1, b1, w23, b23, w4, b4)

    return out[:B].reshape(B, 1, 28, 28)   # nn.Unflatten(1, (1, 28, 28))


def init_params(key):
    """PyTorch-like nn.Linear default init (uniform +/- 1/sqrt(fan_in)).

    Weights stored as (in_features, out_features); biases as (1, out_features).
    """
    def linear(key, fan_in, fan_out):
        kw, kb = jax.random.split(key)
        bound = 1.0 / jnp.sqrt(fan_in)
        w = jax.random.uniform(kw, (fan_in, fan_out), jnp.float32, -bound, bound)
        b = jax.random.uniform(kb, (1, fan_out), jnp.float32, -bound, bound)
        return w, b

    k1, k2, k3, k4 = jax.random.split(key, 4)
    w1, b1 = linear(k1, IN_DIM, HID_DIM)       # encoder Linear(784, 128)
    w2, b2 = linear(k2, HID_DIM, LATENT_DIM)   # encoder Linear(128, 100)
    w3, b3 = linear(k3, LATENT_DIM, HID_DIM)   # decoder Linear(100, 128)
    w4, b4 = linear(k4, HID_DIM, IN_DIM)       # decoder Linear(128, 784)
    return (w1, b1, w2, b2, w3, b3, w4, b4)


def reference_forward(x_nchw, params):
    """Pure-JAX reference (un-fused, f32) for correctness checking."""
    (w1, b1, w2, b2, w3, b3, w4, b4) = params
    B = x_nchw.shape[0]
    x = x_nchw.reshape(B, IN_DIM)
    h1 = jnp.maximum(x @ w1 + b1, 0.0)
    z = h1 @ w2 + b2                       # 100-dim latent (not materialized in kernel)
    h2 = jnp.maximum(z @ w3 + b3, 0.0)
    y = jax.nn.sigmoid(h2 @ w4 + b4)
    return y.reshape(B, 1, 28, 28)


if __name__ == "__main__":
    key = jax.random.PRNGKey(0)
    kx, kx2, kp = jax.random.split(key, 3)
    params = init_params(kp)

    # 1) f32 compute / f32 output — exact path (B=2, single grid step).
    prep_f32 = prepare_params(params, compute_dtype=jnp.float32)
    B = 2
    x = jax.random.uniform(kx, (B, 1, 28, 28), jnp.float32)
    out = jax.block_until_ready(autoencoder_forward(x, prep_f32))
    ref = reference_forward(x, params)
    assert out.shape == (B, 1, 28, 28), out.shape
    assert jnp.allclose(out, ref, atol=1e-4, rtol=1e-4), "f32 mismatch vs reference"

    # 2) Ragged multi-step grid (B=40, block_b=16 -> 3 steps) in f32.
    B2 = 40
    x2 = jax.random.uniform(kx2, (B2, 1, 28, 28), jnp.float32)
    out2 = jax.block_until_ready(autoencoder_forward(x2, prep_f32, block_b=16))
    ref2 = reference_forward(x2, params)
    assert out2.shape == (B2, 1, 28, 28), out2.shape
    assert jnp.allclose(out2, ref2, atol=1e-4, rtol=1e-4), "tiled f32 mismatch"

    # 3) Default bf16 compute path (v6e/v7x bandwidth), f32 output.
    #    Also exercises the grid_b>=2 (megacore occupancy) tiling path.
    prep_bf16 = prepare_params(params)     # compute_dtype=bfloat16 (default)
    out3 = jax.block_until_ready(autoencoder_forward(x2, prep_bf16))
    assert jnp.allclose(out3, ref2, atol=5e-2, rtol=5e-2), "bf16 mismatch"

    # 4) bf16 output stream (halves the dominant HBM write), loose tolerance.
    out4 = jax.block_until_ready(
        autoencoder_forward(x2, prep_bf16, out_dtype=jnp.bfloat16))
    assert out4.dtype == jnp.bfloat16
    assert jnp.allclose(out4.astype(jnp.float32), ref2, atol=5e-2, rtol=5e-2), \
        "bf16-out mismatch"

    print("KERNEL_OK")
</pallas_src>

<mosaic_0001>
module attributes {stable_mosaic.version = 11 : i64} {
  func.func @autoencoder_kernel(%arg0: i32, %arg1: memref<8x784xf32, #tpu.memory_space<vmem>>, %arg2: memref<784x128xf32, #tpu.memory_space<vmem>>, %arg3: memref<1x128xf32, #tpu.memory_space<vmem>>, %arg4: memref<128x128xf32, #tpu.memory_space<vmem>>, %arg5: memref<1x128xf32, #tpu.memory_space<vmem>>, %arg6: memref<128x784xf32, #tpu.memory_space<vmem>>, %arg7: memref<1x784xf32, #tpu.memory_space<vmem>>, %arg8: memref<8x784xf32, #tpu.memory_space<vmem>>) attributes {dimension_semantics = [#tpu.dimension_semantics<parallel>], iteration_bounds = array<i64: 1>, scalar_prefetch = 0 : i64, scratch_operands = 0 : i64, tpu.core_type = #tpu.core_type<tc>, window_params = [{transform_indices = @transform_0, window_bounds = array<i64: 8, 784>}, {pipeline_mode = #tpu.pipeline_mode<synchronous>, transform_indices = @transform_1, window_bounds = array<i64: 784, 128>}, {pipeline_mode = #tpu.pipeline_mode<synchronous>, transform_indices = @transform_2, window_bounds = array<i64: 1, 128>}, {pipeline_mode = #tpu.pipeline_mode<synchronous>, transform_indices = @transform_3, window_bounds = array<i64: 128, 128>}, {pipeline_mode = #tpu.pipeline_mode<synchronous>, transform_indices = @transform_4, window_bounds = array<i64: 1, 128>}, {pipeline_mode = #tpu.pipeline_mode<synchronous>, transform_indices = @transform_5, window_bounds = array<i64: 128, 784>}, {pipeline_mode = #tpu.pipeline_mode<synchronous>, transform_indices = @transform_6, window_bounds = array<i64: 1, 784>}, {transform_indices = @transform_7, window_bounds = array<i64: 8, 784>}]} {
    %c0 = arith.constant 0 : index
    %c0_0 = arith.constant 0 : index
    %0 = vector.load %arg1[%c0, %c0_0] : memref<8x784xf32, #tpu.memory_space<vmem>>, vector<8x784xf32>
    %c0_1 = arith.constant 0 : index
    %c0_2 = arith.constant 0 : index
    %1 = vector.load %arg2[%c0_1, %c0_2] : memref<784x128xf32, #tpu.memory_space<vmem>>, vector<784x128xf32>
    %cst = arith.constant dense<0.000000e+00> : vector<8x128xf32>
    %2 = tpu.matmul %0, %1, %cst {dimension_numbers = #tpu.dot_dimension_numbers<[1], [0], [0], [1], [0, 0, 1, 1], [], []>} : vector<8x784xf32>, vector<784x128xf32>, vector<8x128xf32> -> vector<8x128xf32>
    %c0_3 = arith.constant 0 : index
    %c0_4 = arith.constant 0 : index
    %3 = vector.load %arg3[%c0_3, %c0_4] : memref<1x128xf32, #tpu.memory_space<vmem>>, vector<1x128xf32>
    %4 = vector.broadcast %3 : vector<1x128xf32> to vector<8x128xf32>
    %5 = arith.addf %2, %4 : vector<8x128xf32>
    %cst_5 = arith.constant 0.000000e+00 : f32
    %6 = vector.broadcast %cst_5 : f32 to vector<8x128xf32>
    %7 = arith.maximumf %5, %6 : vector<8x128xf32>
    %c0_6 = arith.constant 0 : index
    %c0_7 = arith.constant 0 : index
    %8 = vector.load %arg4[%c0_6, %c0_7] : memref<128x128xf32, #tpu.memory_space<vmem>>, vector<128x128xf32>
    %cst_8 = arith.constant dense<0.000000e+00> : vector<8x128xf32>
    %9 = tpu.matmul %7, %8, %cst_8 {dimension_numbers = #tpu.dot_dimension_numbers<[1], [0], [0], [1], [0, 0, 1, 1], [], []>} : vector<8x128xf32>, vector<128x128xf32>, vector<8x128xf32> -> vector<8x128xf32>
    %c0_9 = arith.constant 0 : index
    %c0_10 = arith.constant 0 : index
    %10 = vector.load %arg5[%c0_9, %c0_10] : memref<1x128xf32, #tpu.memory_space<vmem>>, vector<1x128xf32>
    %11 = vector.broadcast %10 : vector<1x128xf32> to vector<8x128xf32>
    %12 = arith.addf %9, %11 : vector<8x128xf32>
    %cst_11 = arith.constant 0.000000e+00 : f32
    %13 = vector.broadcast %cst_11 : f32 to vector<8x128xf32>
    %14 = arith.maximumf %12, %13 : vector<8x128xf32>
    %c0_12 = arith.constant 0 : index
    %c0_13 = arith.constant 0 : index
    %15 = vector.load %arg6[%c0_12, %c0_13] : memref<128x784xf32, #tpu.memory_space<vmem>>, vector<128x784xf32>
    %cst_14 = arith.constant dense<0.000000e+00> : vector<8x784xf32>
    %16 = tpu.matmul %14, %15, %cst_14 {dimension_numbers = #tpu.dot_dimension_numbers<[1], [0], [0], [1], [0, 0, 1, 1], [], []>} : vector<8x128xf32>, vector<128x784xf32>, vector<8x784xf32> -> vector<8x784xf32>
    %c0_15 = arith.constant 0 : index
    %c0_16 = arith.constant 0 : index
    %17 = vector.load %arg7[%c0_15, %c0_16] : memref<1x784xf32, #tpu.memory_space<vmem>>, vector<1x784xf32>
    %18 = vector.broadcast %17 : vector<1x784xf32> to vector<8x784xf32>
    %19 = arith.addf %16, %18 : vector<8x784xf32>
    %20 = arith.negf %19 : vector<8x784xf32>
    %21 = math.exp %20 : vector<8x784xf32>
    %cst_17 = arith.constant 1.000000e+00 : f32
    %22 = vector.broadcast %cst_17 : f32 to vector<8x784xf32>
    %23 = arith.addf %22, %21 : vector<8x784xf32>
    %24 = arith.divf %22, %23 : vector<8x784xf32>
    %c0_18 = arith.constant 0 : index
    %c0_19 = arith.constant 0 : index
    %25 = vector.load %arg8[%c0_18, %c0_19] : memref<8x784xf32, #tpu.memory_space<vmem>>, vector<8x784xf32>
    tpu.vector_store %arg8[%c0_18, %c0_19], %24 {strides = array<i32>} : memref<8x784xf32, #tpu.memory_space<vmem>>, vector<8x784xf32>,
    return
  }
  func.func @transform_0(%arg0: i32) -> (i32, i32) {
    %c0_i32 = arith.constant 0 : i32
    %c0_i32_0 = arith.constant 0 : i32
    return %arg0, %c0_i32 : i32, i32
  }
  func.func @transform_1(%arg0: i32) -> (i32, i32) {
    %c0_i32 = arith.constant 0 : i32
    %c0_i32_0 = arith.constant 0 : i32
    %c0_i32_1 = arith.constant 0 : i32
    return %c0_i32, %c0_i32_0 : i32, i32
  }
  func.func @transform_2(%arg0: i32) -> (i32, i32) {
    %c0_i32 = arith.constant 0 : i32
    %c0_i32_0 = arith.constant 0 : i32
    %c0_i32_1 = arith.constant 0 : i32
    return %c0_i32, %c0_i32_0 : i32, i32
  }
  func.func @transform_3(%arg0: i32) -> (i32, i32) {
    %c0_i32 = arith.constant 0 : i32
    %c0_i32_0 = arith.constant 0 : i32
    %c0_i32_1 = arith.constant 0 : i32
    return %c0_i32, %c0_i32_0 : i32, i32
  }
  func.func @transform_4(%arg0: i32) -> (i32, i32) {
    %c0_i32 = arith.constant 0 : i32
    %c0_i32_0 = arith.constant 0 : i32
    %c0_i32_1 = arith.constant 0 : i32
    return %c0_i32, %c0_i32_0 : i32, i32
  }
  func.func @transform_5(%arg0: i32) -> (i32, i32) {
    %c0_i32 = arith.constant 0 : i32
    %c0_i32_0 = arith.constant 0 : i32
    %c0_i32_1 = arith.constant 0 : i32
    return %c0_i32, %c0_i32_0 : i32, i32
  }
  func.func @transform_6(%arg0: i32) -> (i32, i32) {
    %c0_i32 = arith.constant 0 : i32
    %c0_i32_0 = arith.constant 0 : i32
    %c0_i32_1 = arith.constant 0 : i32
    return %c0_i32, %c0_i32_0 : i32, i32
  }
  func.func @transform_7(%arg0: i32) -> (i32, i32) {
    %c0_i32 = arith.constant 0 : i32
    %c0_i32_0 = arith.constant 0 : i32
    return %arg0, %c0_i32 : i32, i32
  }
}

</mosaic_0001>

<llo_original>
// kernel: autoencoder_forward.1
$region0: #{autoencoder_forward.1}
  #allocation0 [shape = 'u32[]', space=smem, size = 0x4, offset = 0x4, fixed_abs, tag = 'smem constant byte address 0x4 - core index']
  #allocation1 [shape = 'u32[144,128]{1,0:T(1,128)}', space=vmem, size = 0x12000, scoped, tag = 'internal scratch']
  %s0 = inlined_call_operand.vmem [shape: f32[8,784], index: 0, kind: input, shape index: {}]
  %s1 = inlined_call_operand.vmem [shape: f32[784,128], index: 1, kind: input, shape index: {}]
  %s2 = inlined_call_operand.vmem [shape: f32[1,128], index: 2, kind: input, shape index: {}]
  %s3 = inlined_call_operand.vmem [shape: f32[128,128], index: 3, kind: input, shape index: {}]
  %s4 = inlined_call_operand.vmem [shape: f32[1,128], index: 4, kind: input, shape index: {}]
  %s5 = inlined_call_operand.vmem [shape: f32[128,784], index: 5, kind: input, shape index: {}]
  %s6 = inlined_call_operand.vmem [shape: f32[1,784], index: 6, kind: input, shape index: {}]
  %s7 = inlined_call_operand.vmem [shape: f32[8,784], index: 7, kind: output, shape index: {}]
  %s8 = sld [smem:[#allocation0]]
  $region38: #{autoencoder_forward.1} parent=0
    _
  %s10 = ssub.s32 1, %s8
  %s11 = scalar_select 0, %s10, %s8
  // Predicated region
  $region2: #{autoencoder_forward.1} parent=0 // pred_check
    _
  $region3: #{autoencoder_forward.1} parent=0 // pred_check_branch
    %13 = sbr.rel (0) target = $region5
  $region4: #{autoencoder_forward.1} parent=0 // pred_region
    _
  $region5: #{autoencoder_forward.1} parent=0 // pred_fallthru
    _
  // Predicated region
  $region6: #{autoencoder_forward.1} parent=0 // pred_check
    _
  $region7: #{autoencoder_forward.1} parent=0 // pred_check_branch
    %15 = sbr.rel (0) target = $region9
  $region8: #{autoencoder_forward.1} parent=0 // pred_region
    _
  $region9: #{autoencoder_forward.1} parent=0 // pred_fallthru
    _
  // Predicated region
  $region10: #{autoencoder_forward.1} parent=0 // pred_check
    _
  $region11: #{autoencoder_forward.1} parent=0 // pred_check_branch
    %17 = sbr.rel (0) target = $region13
  $region12: #{autoencoder_forward.1} parent=0 // pred_region
    _
  $region13: #{autoencoder_forward.1} parent=0 // pred_fallthru
    _
  // Predicated region
  $region14: #{autoencoder_forward.1} parent=0 // pred_check
    _
  $region15: #{autoencoder_forward.1} parent=0 // pred_check_branch
    %19 = sbr.rel (0) target = $region17
  $region16: #{autoencoder_forward.1} parent=0 // pred_region
    _
  $region17: #{autoencoder_forward.1} parent=0 // pred_fallthru
    _
  // Predicated region
  $region18: #{autoencoder_forward.1} parent=0 // pred_check
    _
  $region19: #{autoencoder_forward.1} parent=0 // pred_check_branch
    %21 = sbr.rel (0) target = $region21
  $region20: #{autoencoder_forward.1} parent=0 // pred_region
    _
  $region21: #{autoencoder_forward.1} parent=0 // pred_fallthru
    _
  // Predicated region
  $region22: #{autoencoder_forward.1} parent=0 // pred_check
    _
  $region23: #{autoencoder_forward.1} parent=0 // pred_check_branch
    %23 = sbr.rel (0) target = $region25
  $region24: #{autoencoder_forward.1} parent=0 // pred_region
    _
  $region25: #{autoencoder_forward.1} parent=0 // pred_fallthru
    _
  // Predicated region
  $region26: #{autoencoder_forward.1} parent=0 // pred_check
    _
  $region27: #{autoencoder_forward.1} parent=0 // pred_check_branch
    %25 = sbr.rel (0) target = $region29
  $region28: #{autoencoder_forward.1} parent=0 // pred_region
    _
  $region29: #{autoencoder_forward.1} parent=0 // pred_fallthru
    _
  %v26 = vld [vmem:[%s0] sm:$0xff]
  %v27 = vld [vmem:[%s0 + $0x8] sm:$0xff]
  %v28 = vld [vmem:[%s0 + $0x10] sm:$0xff]
  %v29 = vld [vmem:[%s0 + $0x18] sm:$0xff]
  %v30 = vld [vmem:[%s0 + $0x20] sm:$0xff]
  %v31 = vld [vmem:[%s0 + $0x28] sm:$0xff]
  %v32 = vld [vmem:[%s0 + $0x30] sm:$0xff]
  %v33 = vld [vmem:[%s1] sm:$0xff]
  %v34 = vld [vmem:[%s1 + $0x8] sm:$0xff]
  %v35 = vld [vmem:[%s1 + $0x10] sm:$0xff]
  %v36 = vld [vmem:[%s1 + $0x18] sm:$0xff]
  %v37 = vld [vmem:[%s1 + $0x20] sm:$0xff]
  %v38 = vld [vmem:[%s1 + $0x28] sm:$0xff]
  %v39 = vld [vmem:[%s1 + $0x30] sm:$0xff]
  %v40 = vld [vmem:[%s1 + $0x38] sm:$0xff]
  %v41 = vld [vmem:[%s1 + $0x40] sm:$0xff]
  %v42 = vld [vmem:[%s1 + $0x48] sm:$0xff]
  %v43 = vld [vmem:[%s1 + $0x50] sm:$0xff]
  %v44 = vld [vmem:[%s1 + $0x58] sm:$0xff]
  %v45 = vld [vmem:[%s1 + $0x60] sm:$0xff]
  %v46 = vld [vmem:[%s1 + $0x68] sm:$0xff]
  %v47 = vld [vmem:[%s1 + $0x70] sm:$0xff]
  %v48 = vld [vmem:[%s1 + $0x78] sm:$0xff]
  %v49 = vld [vmem:[%s1 + $0x80] sm:$0xff]
  %v50 = vld [vmem:[%s1 + $0x88] sm:$0xff]
  %v51 = vld [vmem:[%s1 + $0x90] sm:$0xff]
  %v52 = vld [vmem:[%s1 + $0x98] sm:$0xff]
  %v53 = vld [vmem:[%s1 + $0xa0] sm:$0xff]
  %v54 = vld [vmem:[%s1 + $0xa8] sm:$0xff]
  %v55 = vld [vmem:[%s1 + $0xb0] sm:$0xff]
  %v56 = vld [vmem:[%s1 + $0xb8] sm:$0xff]
  %v57 = vld [vmem:[%s1 + $0xc0] sm:$0xff]
  %v58 = vld [vmem:[%s1 + $0xc8] sm:$0xff]
  %v59 = vld [vmem:[%s1 + $0xd0] sm:$0xff]
  %v60 = vld [vmem:[%s1 + $0xd8] sm:$0xff]
  %v61 = vld [vmem:[%s1 + $0xe0] sm:$0xff]
  %v62 = vld [vmem:[%s1 + $0xe8] sm:$0xff]
  %v63 = vld [vmem:[%s1 + $0xf0] sm:$0xff]
  %v64 = vld [vmem:[%s1 + $0xf8] sm:$0xff]
  %v65 = vld [vmem:[%s1 + $0x100] sm:$0xff]
  %v66 = vld [vmem:[%s1 + $0x108] sm:$0xff]
  %v67 = vld [vmem:[%s1 + $0x110] sm:$0xff]
  %v68 = vld [vmem:[%s1 + $0x118] sm:$0xff]
  %v69 = vld [vmem:[%s1 + $0x120] sm:$0xff]
  %v70 = vld [vmem:[%s1 + $0x128] sm:$0xff]
  %v71 = vld [vmem:[%s1 + $0x130] sm:$0xff]
  %v72 = vld [vmem:[%s1 + $0x138] sm:$0xff]
  %v73 = vld [vmem:[%s1 + $0x140] sm:$0xff]
  %v74 = vld [vmem:[%s1 + $0x148] sm:$0xff]
  %v75 = vld [vmem:[%s1 + $0x150] sm:$0xff]
  %v76 = vld [vmem:[%s1 + $0x158] sm:$0xff]
  %v77 = vld [vmem:[%s1 + $0x160] sm:$0xff]
  %v78 = vld [vmem:[%s1 + $0x168] sm:$0xff]
  %v79 = vld [vmem:[%s1 + $0x170] sm:$0xff]
  %v80 = vld [vmem:[%s1 + $0x178] sm:$0xff]
  %v81 = vld [vmem:[%s1 + $0x180] sm:$0xff]
  %v82 = vld [vmem:[%s1 + $0x188] sm:$0xff]
  %v83 = vld [vmem:[%s1 + $0x190] sm:$0xff]
  %v84 = vld [vmem:[%s1 + $0x198] sm:$0xff]
  %v85 = vld [vmem:[%s1 + $0x1a0] sm:$0xff]
  %v86 = vld [vmem:[%s1 + $0x1a8] sm:$0xff]
  %v87 = vld [vmem:[%s1 + $0x1b0] sm:$0xff]
  %v88 = vld [vmem:[%s1 + $0x1b8] sm:$0xff]
  %v89 = vld [vmem:[%s1 + $0x1c0] sm:$0xff]
  %v90 = vld [vmem:[%s1 + $0x1c8] sm:$0xff]
  %v91 = vld [vmem:[%s1 + $0x1d0] sm:$0xff]
  %v92 = vld [vmem:[%s1 + $0x1d8] sm:$0xff]
  %v93 = vld [vmem:[%s1 + $0x1e0] sm:$0xff]
  %v94 = vld [vmem:[%s1 + $0x1e8] sm:$0xff]
  %v95 = vld [vmem:[%s1 + $0x1f0] sm:$0xff]
  %v96 = vld [vmem:[%s1 + $0x1f8] sm:$0xff]
  %v97 = vld [vmem:[%s1 + $0x200] sm:$0xff]
  %v98 = vld [vmem:[%s1 + $0x208] sm:$0xff]
  %v99 = vld [vmem:[%s1 + $0x210] sm:$0xff]
  %v100 = vld [vmem:[%s1 + $0x218] sm:$0xff]
  %v101 = vld [vmem:[%s1 + $0x220] sm:$0xff]
  %v102 = vld [vmem:[%s1 + $0x228] sm:$0xff]
  %v103 = vld [vmem:[%s1 + $0x230] sm:$0xff]
  %v104 = vld [vmem:[%s1 + $0x238] sm:$0xff]
  %v105 = vld [vmem:[%s1 + $0x240] sm:$0xff]
  %v106 = vld [vmem:[%s1 + $0x248] sm:$0xff]
  %v107 = vld [vmem:[%s1 + $0x250] sm:$0xff]
  %v108 = vld [vmem:[%s1 + $0x258] sm:$0xff]
  %v109 = vld [vmem:[%s1 + $0x260] sm:$0xff]
  %v110 = vld [vmem:[%s1 + $0x268] sm:$0xff]
  %v111 = vld [vmem:[%s1 + $0x270] sm:$0xff]
  %v112 = vld [vmem:[%s1 + $0x278] sm:$0xff]
  %v113 = vld [vmem:[%s1 + $0x280] sm:$0xff]
  %v114 = vld [vmem:[%s1 + $0x288] sm:$0xff]
  %v115 = vld [vmem:[%s1 + $0x290] sm:$0xff]
  %v116 = vld [vmem:[%s1 + $0x298] sm:$0xff]
  %v117 = vld [vmem:[%s1 + $0x2a0] sm:$0xff]
  %v118 = vld [vmem:[%s1 + $0x2a8] sm:$0xff]
  %v119 = vld [vmem:[%s1 + $0x2b0] sm:$0xff]
  %v120 = vld [vmem:[%s1 + $0x2b8] sm:$0xff]
  %v121 = vld [vmem:[%s1 + $0x2c0] sm:$0xff]
  %v122 = vld [vmem:[%s1 + $0x2c8] sm:$0xff]
  %v123 = vld [vmem:[%s1 + $0x2d0] sm:$0xff]
  %v124 = vld [vmem:[%s1 + $0x2d8] sm:$0xff]
  %v125 = vld [vmem:[%s1 + $0x2e0] sm:$0xff]
  %v126 = vld [vmem:[%s1 + $0x2e8] sm:$0xff]
  %v127 = vld [vmem:[%s1 + $0x2f0] sm:$0xff]
  %v128 = vld [vmem:[%s1 + $0x2f8] sm:$0xff]
  %v129 = vld [vmem:[%s1 + $0x300] sm:$0xff]
  %v130 = vld [vmem:[%s1 + $0x308] sm:$0xff]
  %v131 = vld [vmem:[%s2] sm:$0x1]
  %v133 = vlaneseq
  %v134 = vshrl.u32 %v133, 7
  %v135 = vsub.s32 0, %v134
  %v136 = vrot.slane %v131, %v135
  %vm138 = vcmask 130048
  %v140 = vsel %vm138, %v32, 0
  %142 = vmatprep.subr.mxu0 0.0
  %143 = vmatpush1.msra.mxu0 %v33
  %144 = vmatprep.subr.mxu0 0.0
  %145 = vmatpush1.msra.mxu0 %v34
  %146 = vmatprep.subr.mxu0 0.0
  %147 = vmatpush1.msra.mxu0 %v35
  %148 = vmatprep.subr.mxu0 0.0
  %149 = vmatpush1.msra.mxu0 %v36
  %150 = vmatprep.subr.mxu0 0.0
  %151 = vmatpush1.msra.mxu0 %v37
  %152 = vmatprep.subr.mxu0 0.0
  %153 = vmatpush1.msra.mxu0 %v38
  %154 = vmatprep.subr.mxu0 0.0
  %155 = vmatpush1.msra.mxu0 %v39
  %156 = vmatprep.subr.mxu0 0.0
  %157 = vmatpush1.msra.mxu0 %v40
  %158 = vmatprep.subr.mxu0 0.0
  %159 = vmatpush1.msra.mxu0 %v41
  %160 = vmatprep.subr.mxu0 0.0
  %161 = vmatpush1.msra.mxu0 %v42
  %162 = vmatprep.subr.mxu0 0.0
  %163 = vmatpush1.msra.mxu0 %v43
  %164 = vmatprep.subr.mxu0 0.0
  %165 = vmatpush1.msra.mxu0 %v44
  %166 = vmatprep.subr.mxu0 0.0
  %167 = vmatpush1.msra.mxu0 %v45
  %168 = vmatprep.subr.mxu0 0.0
  %169 = vmatpush1.msra.mxu0 %v46
  %170 = vmatprep.subr.mxu0 0.0
  %171 = vmatpush1.msra.mxu0 %v47
  %172 = vmatprep.subr.mxu0 0.0
  %173 = vmatpush1.msra.mxu0 %v48
  %174 = vmatprep.subr.mxu0 0.0
  %175 = vmatpush1.msra.mxu0 %v49
  %176 = vmatprep.subr.mxu0 0.0
  %177 = vmatpush1.msra.mxu0 %v50
  %178 = vmatprep.subr.mxu0 0.0
  %179 = vmatpush1.msra.mxu0 %v51
  %180 = vmatprep.subr.mxu0 0.0
  %181 = vmatpush1.msra.mxu0 %v52
  %182 = vmatprep.subr.mxu0 0.0
  %183 = vmatpush1.msra.mxu0 %v53
  %184 = vmatprep.subr.mxu0 0.0
  %185 = vmatpush1.msra.mxu0 %v54
  %186 = vmatprep.subr.mxu0 0.0
  %187 = vmatpush1.msra.mxu0 %v55
  %188 = vmatprep.subr.mxu0 0.0
  %189 = vmatpush1.msra.mxu0 %v56
  %190 = vmatprep.subr.mxu0 0.0
  %191 = vmatpush1.msra.mxu0 %v57
  %192 = vmatprep.subr.mxu0 0.0
  %193 = vmatpush1.msra.mxu0 %v58
  %194 = vmatprep.subr.mxu0 0.0
  %195 = vmatpush1.msra.mxu0 %v59
  %196 = vmatprep.subr.mxu0 0.0
  %197 = vmatpush1.msra.mxu0 %v60
  %198 = vmatprep.subr.mxu0 0.0
  %199 = vmatpush1.msra.mxu0 %v61
  %200 = vmatprep.subr.mxu0 0.0
  %201 = vmatpush1.msra.mxu0 %v62
  %202 = vmatprep.subr.mxu0 0.0
  %203 = vmatpush1.msra.mxu0 %v63
  %204 = vmatprep.subr.mxu0 0.0
  %205 = vmatpush1.msra.mxu0 %v64
  %206 = vmatprep.mubr.f32.mxu0 %v27
  %207 = vmatmul.mubr.f32.gmra.mrb[0].mxu0 %v26
  %v208 = vpop.f32.mrb[0].mxu0
  %v209 = vadd.f32 %v136, %v208
  %v210 = vpop.f32.mrb[0].mxu0
  %211 = vdwg.mxu0
  %212 = vmatprep.subr.mxu0 0.0
  %213 = vmatpush1.msra.mxu0 %v65
  %214 = vmatprep.subr.mxu0 0.0
  %215 = vmatpush1.msra.mxu0 %v66
  %216 = vmatprep.subr.mxu0 0.0
  %217 = vmatpush1.msra.mxu0 %v67
  %218 = vmatprep.subr.mxu0 0.0
  %219 = vmatpush1.msra.mxu0 %v68
  %220 = vmatprep.subr.mxu0 0.0
  %221 = vmatpush1.msra.mxu0 %v69
  %222 = vmatprep.subr.mxu0 0.0
  %223 = vmatpush1.msra.mxu0 %v70
  %224 = vmatprep.subr.mxu0 0.0
  %225 = vmatpush1.msra.mxu0 %v71
  %226 = vmatprep.subr.mxu0 0.0
  %227 = vmatpush1.msra.mxu0 %v72
  %228 = vmatprep.subr.mxu0 0.0
  %229 = vmatpush1.msra.mxu0 %v73
  %230 = vmatprep.subr.mxu0 0.0
  %231 = vmatpush1.msra.mxu0 %v74
  %232 = vmatprep.subr.mxu0 0.0
  %233 = vmatpush1.msra.mxu0 %v75
  %234 = vmatprep.subr.mxu0 0.0
  %235 = vmatpush1.msra.mxu0 %v76
  %236 = vmatprep.subr.mxu0 0.0
  %237 = vmatpush1.msra.mxu0 %v77
  %238 = vmatprep.subr.mxu0 0.0
  %239 = vmatpush1.msra.mxu0 %v78
  %240 = vmatprep.subr.mxu0 0.0
  %241 = vmatpush1.msra.mxu0 %v79
  %242 = vmatprep.subr.mxu0 0.0
  %243 = vmatpush1.msra.mxu0 %v80
  %244 = vmatprep.subr.mxu0 0.0
  %245 = vmatpush1.msra.mxu0 %v81
  %246 = vmatprep.subr.mxu0 0.0
  %247 = vmatpush1.msra.mxu0 %v82
  %248 = vmatprep.subr.mxu0 0.0
  %249 = vmatpush1.msra.mxu0 %v83
  %250 = vmatprep.subr.mxu0 0.0
  %251 = vmatpush1.msra.mxu0 %v84
  %252 = vmatprep.subr.mxu0 0.0
  %253 = vmatpush1.msra.mxu0 %v85
  %254 = vmatprep.subr.mxu0 0.0
  %255 = vmatpush1.msra.mxu0 %v86
  %256 = vmatprep.subr.mxu0 0.0
  %257 = vmatpush1.msra.mxu0 %v87
  %258 = vmatprep.subr.mxu0 0.0
  %259 = vmatpush1.msra.mxu0 %v88
  %260 = vmatprep.subr.mxu0 0.0
  %261 = vmatpush1.msra.mxu0 %v89
  %262 = vmatprep.subr.mxu0 0.0
  %263 = vmatpush1.msra.mxu0 %v90
  %264 = vmatprep.subr.mxu0 0.0
  %265 = vmatpush1.msra.mxu0 %v91
  %266 = vmatprep.subr.mxu0 0.0
  %267 = vmatpush1.msra.mxu0 %v92
  %268 = vmatprep.subr.mxu0 0.0
  %269 = vmatpush1.msra.mxu0 %v93
  %270 = vmatprep.subr.mxu0 0.0
  %271 = vmatpush1.msra.mxu0 %v94
  %272 = vmatprep.subr.mxu0 0.0
  %273 = vmatpush1.msra.mxu0 %v95
  %274 = vmatprep.subr.mxu0 0.0
  %275 = vmatpush1.msra.mxu0 %v96
  %276 = vmatprep.mubr.f32.mxu0 %v29
  %277 = vmatmul.mubr.f32.gmra.mrb[0].mxu0 %v28
  %v278 = vpop.f32.mrb[0].mxu0
  %v279 = vadd.f32 %v209, %v278
  %v280 = vpop.f32.mrb[0].mxu0
  %281 = vdwg.mxu0
  %282 = vmatprep.subr.mxu0 0.0
  %283 = vmatpush1.msra.mxu0 %v97
  %284 = vmatprep.subr.mxu0 0.0
  %285 = vmatpush1.msra.mxu0 %v98
  %286 = vmatprep.subr.mxu0 0.0
  %287 = vmatpush1.msra.mxu0 %v99
  %288 = vmatprep.subr.mxu0 0.0
  %289 = vmatpush1.msra.mxu0 %v100
  %290 = vmatprep.subr.mxu0 0.0
  %291 = vmatpush1.msra.mxu0 %v101
  %292 = vmatprep.subr.mxu0 0.0
  %293 = vmatpush1.msra.mxu0 %v102
  %294 = vmatprep.subr.mxu0 0.0
  %295 = vmatpush1.msra.mxu0 %v103
  %296 = vmatprep.subr.mxu0 0.0
  %297 = vmatpush1.msra.mxu0 %v104
  %298 = vmatprep.subr.mxu0 0.0
  %299 = vmatpush1.msra.mxu0 %v105
  %300 = vmatprep.subr.mxu0 0.0
  %301 = vmatpush1.msra.mxu0 %v106
  %302 = vmatprep.subr.mxu0 0.0
  %303 = vmatpush1.msra.mxu0 %v107
  %304 = vmatprep.subr.mxu0 0.0
  %305 = vmatpush1.msra.mxu0 %v108
  %306 = vmatprep.subr.mxu0 0.0
  %307 = vmatpush1.msra.mxu0 %v109
  %308 = vmatprep.subr.mxu0 0.0
  %309 = vmatpush1.msra.mxu0 %v110
  %310 = vmatprep.subr.mxu0 0.0
  %311 = vmatpush1.msra.mxu0 %v111
  %312 = vmatprep.subr.mxu0 0.0
  %313 = vmatpush1.msra.mxu0 %v112
  %314 = vmatprep.subr.mxu0 0.0
  %315 = vmatpush1.msra.mxu0 %v113
  %316 = vmatprep.subr.mxu0 0.0
  %317 = vmatpush1.msra.mxu0 %v114
  %318 = vmatprep.subr.mxu0 0.0
  %319 = vmatpush1.msra.mxu0 %v115
  %320 = vmatprep.subr.mxu0 0.0
  %321 = vmatpush1.msra.mxu0 %v116
  %322 = vmatprep.subr.mxu0 0.0
  %323 = vmatpush1.msra.mxu0 %v117
  %324 = vmatprep.subr.mxu0 0.0
  %325 = vmatpush1.msra.mxu0 %v118
  %326 = vmatprep.subr.mxu0 0.0
  %327 = vmatpush1.msra.mxu0 %v119
  %328 = vmatprep.subr.mxu0 0.0
  %329 = vmatpush1.msra.mxu0 %v120
  %330 = vmatprep.subr.mxu0 0.0
  %331 = vmatpush1.msra.mxu0 %v121
  %332 = vmatprep.subr.mxu0 0.0
  %333 = vmatpush1.msra.mxu0 %v122
  %334 = vmatprep.subr.mxu0 0.0
  %335 = vmatpush1.msra.mxu0 %v123
  %336 = vmatprep.subr.mxu0 0.0
  %337 = vmatpush1.msra.mxu0 %v124
  %338 = vmatprep.subr.mxu0 0.0
  %339 = vmatpush1.msra.mxu0 %v125
  %340 = vmatprep.subr.mxu0 0.0
  %341 = vmatpush1.msra.mxu0 %v126
  %342 = vmatprep.subr.mxu0 0.0
  %343 = vmatpush1.msra.mxu0 %v127
  %344 = vmatprep.subr.mxu0 0.0
  %345 = vmatpush1.msra.mxu0 %v128
  %346 = vmatprep.mubr.f32.mxu0 %v31
  %347 = vmatmul.mubr.f32.gmra.mrb[0].mxu0 %v30
  %v348 = vpop.f32.mrb[0].mxu0
  %v349 = vadd.f32 %v279, %v348
  %v350 = vpop.f32.mrb[0].mxu0
  %351 = vdwg.mxu0
  %352 = vmatprep.subr.mxu0 0.0
  %353 = vmatpush1.msra.mxu0 %v129
  %354 = vmatprep.subr.mxu0 0.0
  %355 = vmatpush1.msra.mxu0 %v130
  %356 = vmatprep.subr.mxu0 0.0
  %357 = vmatpush1.msra.mxu0 0.0
  %358 = vmatprep.subr.mxu0 0.0
  %359 = vmatpush1.msra.mxu0 0.0
  %360 = vmatprep.subr.mxu0 0.0
  %361 = vmatpush1.msra.mxu0 0.0
  %362 = vmatprep.subr.mxu0 0.0
  %363 = vmatpush1.msra.mxu0 0.0
  %364 = vmatprep.subr.mxu0 0.0
  %365 = vmatpush1.msra.mxu0 0.0
  %366 = vmatprep.subr.mxu0 0.0
  %367 = vmatpush1.msra.mxu0 0.0
  %368 = vmatprep.subr.mxu0 0.0
  %369 = vmatpush1.msra.mxu0 0.0
  %370 = vmatprep.subr.mxu0 0.0
  %371 = vmatpush1.msra.mxu0 0.0
  %372 = vmatprep.subr.mxu0 0.0
  %373 = vmatpush1.msra.mxu0 0.0
  %374 = vmatprep.subr.mxu0 0.0
  %375 = vmatpush1.msra.mxu0 0.0
  %376 = vmatprep.subr.mxu0 0.0
  %377 = vmatpush1.msra.mxu0 0.0
  %378 = vmatprep.subr.mxu0 0.0
  %379 = vmatpush1.msra.mxu0 0.0
  %380 = vmatprep.subr.mxu0 0.0
  %381 = vmatpush1.msra.mxu0 0.0
  %382 = vmatprep.subr.mxu0 0.0
  %383 = vmatpush1.msra.mxu0 0.0
  %384 = vmatprep.subr.mxu0 0.0
  %385 = vmatpush1.msra.mxu0 0.0
  %386 = vmatprep.subr.mxu0 0.0
  %387 = vmatpush1.msra.mxu0 0.0
  %388 = vmatprep.subr.mxu0 0.0
  %389 = vmatpush1.msra.mxu0 0.0
  %390 = vmatprep.subr.mxu0 0.0
  %391 = vmatpush1.msra.mxu0 0.0
  %392 = vmatprep.subr.mxu0 0.0
  %393 = vmatpush1.msra.mxu0 0.0
  %394 = vmatprep.subr.mxu0 0.0
  %395 = vmatpush1.msra.mxu0 0.0
  %396 = vmatprep.subr.mxu0 0.0
  %397 = vmatpush1.msra.mxu0 0.0
  %398 = vmatprep.subr.mxu0 0.0
  %399 = vmatpush1.msra.mxu0 0.0
  %400 = vmatprep.subr.mxu0 0.0
  %401 = vmatpush1.msra.mxu0 0.0
  %402 = vmatprep.subr.mxu0 0.0
  %403 = vmatpush1.msra.mxu0 0.0
  %404 = vmatprep.subr.mxu0 0.0
  %405 = vmatpush1.msra.mxu0 0.0
  %406 = vmatprep.subr.mxu0 0.0
  %407 = vmatpush1.msra.mxu0 0.0
  %408 = vmatprep.subr.mxu0 0.0
  %409 = vmatpush1.msra.mxu0 0.0
  %410 = vmatprep.subr.mxu0 0.0
  %411 = vmatpush1.msra.mxu0 0.0
  %412 = vmatprep.subr.mxu0 0.0
  %413 = vmatpush1.msra.mxu0 0.0
  %414 = vmatprep.subr.mxu0 0.0
  %415 = vmatpush1.msra.mxu0 0.0
  %416 = vmatprep.mubr.f32.mxu0 0.0
  %417 = vmatmul.mubr.f32.gmra.mrb[0].mxu0 %v140
  %v418 = vpop.f32.mrb[0].mxu0
  %v419 = vadd.f32 %v349, %v418
  %v420 = vpop.f32.mrb[0].mxu0
  %421 = vdwg.mxu0
  %v422 = vmax.f32 %v419, 0.0
  %v423 = vld [vmem:[%s3] sm:$0xff]
  %v424 = vld [vmem:[%s3 + $0x8] sm:$0xff]
  %v425 = vld [vmem:[%s3 + $0x10] sm:$0xff]
  %v426 = vld [vmem:[%s3 + $0x18] sm:$0xff]
  %v427 = vld [vmem:[%s3 + $0x20] sm:$0xff]
  %v428 = vld [vmem:[%s3 + $0x28] sm:$0xff]
  %v429 = vld [vmem:[%s3 + $0x30] sm:$0xff]
  %v430 = vld [vmem:[%s3 + $0x38] sm:$0xff]
  %v431 = vld [vmem:[%s3 + $0x40] sm:$0xff]
  %v432 = vld [vmem:[%s3 + $0x48] sm:$0xff]
  %v433 = vld [vmem:[%s3 + $0x50] sm:$0xff]
  %v434 = vld [vmem:[%s3 + $0x58] sm:$0xff]
  %v435 = vld [vmem:[%s3 + $0x60] sm:$0xff]
  %v436 = vld [vmem:[%s3 + $0x68] sm:$0xff]
  %v437 = vld [vmem:[%s3 + $0x70] sm:$0xff]
  %v438 = vld [vmem:[%s3 + $0x78] sm:$0xff]
  %v439 = vld [vmem:[%s4] sm:$0x1]
  %v441 = vlaneseq
  %v442 = vshrl.u32 %v441, 7
  %v443 = vsub.s32 0, %v442
  %v444 = vrot.slane %v439, %v443
  %446 = vmatprep.subr.mxu0 0.0
  %447 = vmatpush1.msra.mxu0 %v423
  %448 = vmatprep.subr.mxu0 0.0
  %449 = vmatpush1.msra.mxu0 %v424
  %450 = vmatprep.subr.mxu0 0.0
  %451 = vmatpush1.msra.mxu0 %v425
  %452 = vmatprep.subr.mxu0 0.0
  %453 = vmatpush1.msra.mxu0 %v426
  %454 = vmatprep.subr.mxu0 0.0
  %455 = vmatpush1.msra.mxu0 %v427
  %456 = vmatprep.subr.mxu0 0.0
  %457 = vmatpush1.msra.mxu0 %v428
  %458 = vmatprep.subr.mxu0 0.0
  %459 = vmatpush1.msra.mxu0 %v429
  %460 = vmatprep.subr.mxu0 0.0
  %461 = vmatpush1.msra.mxu0 %v430
  %462 = vmatprep.subr.mxu0 0.0
  %463 = vmatpush1.msra.mxu0 %v431
  %464 = vmatprep.subr.mxu0 0.0
  %465 = vmatpush1.msra.mxu0 %v432
  %466 = vmatprep.subr.mxu0 0.0
  %467 = vmatpush1.msra.mxu0 %v433
  %468 = vmatprep.subr.mxu0 0.0
  %469 = vmatpush1.msra.mxu0 %v434
  %470 = vmatprep.subr.mxu0 0.0
  %471 = vmatpush1.msra.mxu0 %v435
  %472 = vmatprep.subr.mxu0 0.0
  %473 = vmatpush1.msra.mxu0 %v436
  %474 = vmatprep.subr.mxu0 0.0
  %475 = vmatpush1.msra.mxu0 %v437
  %476 = vmatprep.subr.mxu0 0.0
  %477 = vmatpush1.msra.mxu0 %v438
  %478 = vmatprep.subr.mxu0 0.0
  %479 = vmatpush1.msra.mxu0 0.0
  %480 = vmatprep.subr.mxu0 0.0
  %481 = vmatpush1.msra.mxu0 0.0
  %482 = vmatprep.subr.mxu0 0.0
  %483 = vmatpush1.msra.mxu0 0.0
  %484 = vmatprep.subr.mxu0 0.0
  %485 = vmatpush1.msra.mxu0 0.0
  %486 = vmatprep.subr.mxu0 0.0
  %487 = vmatpush1.msra.mxu0 0.0
  %488 = vmatprep.subr.mxu0 0.0
  %489 = vmatpush1.msra.mxu0 0.0
  %490 = vmatprep.subr.mxu0 0.0
  %491 = vmatpush1.msra.mxu0 0.0
  %492 = vmatprep.subr.mxu0 0.0
  %493 = vmatpush1.msra.mxu0 0.0
  %494 = vmatprep.subr.mxu0 0.0
  %495 = vmatpush1.msra.mxu0 0.0
  %496 = vmatprep.subr.mxu0 0.0
  %497 = vmatpush1.msra.mxu0 0.0
  %498 = vmatprep.subr.mxu0 0.0
  %499 = vmatpush1.msra.mxu0 0.0
  %500 = vmatprep.subr.mxu0 0.0
  %501 = vmatpush1.msra.mxu0 0.0
  %502 = vmatprep.subr.mxu0 0.0
  %503 = vmatpush1.msra.mxu0 0.0
  %504 = vmatprep.subr.mxu0 0.0
  %505 = vmatpush1.msra.mxu0 0.0
  %506 = vmatprep.subr.mxu0 0.0
  %507 = vmatpush1.msra.mxu0 0.0
  %508 = vmatprep.subr.mxu0 0.0
  %509 = vmatpush1.msra.mxu0 0.0
  %510 = vmatprep.mubr.f32.mxu0 0.0
  %511 = vmatmul.mubr.f32.gmra.mrb[0].mxu0 %v422
  %v512 = vpop.f32.mrb[0].mxu0
  %v513 = vadd.f32 %v444, %v512
  %v514 = vpop.f32.mrb[0].mxu0
  %515 = vdwg.mxu0
  %v516 = vmax.f32 %v513, 0.0
  %v517 = vld [vmem:[%s5] sm:$0xff]
  %v518 = vld [vmem:[%s5 + $0x8] sm:$0xff]
  %v519 = vld [vmem:[%s5 + $0x10] sm:$0xff]
  %v520 = vld [vmem:[%s5 + $0x18] sm:$0xff]
  %v521 = vld [vmem:[%s5 + $0x20] sm:$0xff]
  %v522 = vld [vmem:[%s5 + $0x28] sm:$0xff]
  %v523 = vld [vmem:[%s5 + $0x30] sm:$0xff]
  %v524 = vld [vmem:[%s5 + $0x38] sm:$0xff]
  %v525 = vld [vmem:[%s5 + $0x40] sm:$0xff]
  %v526 = vld [vmem:[%s5 + $0x48] sm:$0xff]
  %v527 = vld [vmem:[%s5 + $0x50] sm:$0xff]
  %v528 = vld [vmem:[%s5 + $0x58] sm:$0xff]
  %v529 = vld [vmem:[%s5 + $0x60] sm:$0xff]
  %v530 = vld [vmem:[%s5 + $0x68] sm:$0xff]
  %v531 = vld [vmem:[%s5 + $0x70] sm:$0xff]
  %v532 = vld [vmem:[%s5 + $0x78] sm:$0xff]
  %v533 = vld [vmem:[%s5 + $0x80] sm:$0xff]
  %v534 = vld [vmem:[%s5 + $0x88] sm:$0xff]
  %v535 = vld [vmem:[%s5 + $0x90] sm:$0xff]
  %v536 = vld [vmem:[%s5 + $0x98] sm:$0xff]
  %v537 = vld [vmem:[%s5 + $0xa0] sm:$0xff]
  %v538 = vld [vmem:[%s5 + $0xa8] sm:$0xff]
  %v539 = vld [vmem:[%s5 + $0xb0] sm:$0xff]
  %v540 = vld [vmem:[%s5 + $0xb8] sm:$0xff]
  %v541 = vld [vmem:[%s5 + $0xc0] sm:$0xff]
  %v542 = vld [vmem:[%s5 + $0xc8] sm:$0xff]
  %v543 = vld [vmem:[%s5 + $0xd0] sm:$0xff]
  %v544 = vld [vmem:[%s5 + $0xd8] sm:$0xff]
  %v545 = vld [vmem:[%s5 + $0xe0] sm:$0xff]
  %v546 = vld [vmem:[%s5 + $0xe8] sm:$0xff]
  %v547 = vld [vmem:[%s5 + $0xf0] sm:$0xff]
  %v548 = vld [vmem:[%s5 + $0xf8] sm:$0xff]
  %v549 = vld [vmem:[%s5 + $0x100] sm:$0xff]
  %v550 = vld [vmem:[%s5 + $0x108] sm:$0xff]
  %v551 = vld [vmem:[%s5 + $0x110] sm:$0xff]
  %v552 = vld [vmem:[%s5 + $0x118] sm:$0xff]
  %v553 = vld [vmem:[%s5 + $0x120] sm:$0xff]
  %v554 = vld [vmem:[%s5 + $0x128] sm:$0xff]
  %v555 = vld [vmem:[%s5 + $0x130] sm:$0xff]
  %v556 = vld [vmem:[%s5 + $0x138] sm:$0xff]
  %v557 = vld [vmem:[%s5 + $0x140] sm:$0xff]
  %v558 = vld [vmem:[%s5 + $0x148] sm:$0xff]
  %v559 = vld [vmem:[%s5 + $0x150] sm:$0xff]
  %v560 = vld [vmem:[%s5 + $0x158] sm:$0xff]
  %v561 = vld [vmem:[%s5 + $0x160] sm:$0xff]
  %v562 = vld [vmem:[%s5 + $0x168] sm:$0xff]
  %v563 = vld [vmem:[%s5 + $0x170] sm:$0xff]
  %v564 = vld [vmem:[%s5 + $0x178] sm:$0xff]
  %v565 = vld [vmem:[%s5 + $0x180] sm:$0xff]
  %v566 = vld [vmem:[%s5 + $0x188] sm:$0xff]
  %v567 = vld [vmem:[%s5 + $0x190] sm:$0xff]
  %v568 = vld [vmem:[%s5 + $0x198] sm:$0xff]
  %v569 = vld [vmem:[%s5 + $0x1a0] sm:$0xff]
  %v570 = vld [vmem:[%s5 + $0x1a8] sm:$0xff]
  %v571 = vld [vmem:[%s5 + $0x1b0] sm:$0xff]
  %v572 = vld [vmem:[%s5 + $0x1b8] sm:$0xff]
  %v573 = vld [vmem:[%s5 + $0x1c0] sm:$0xff]
  %v574 = vld [vmem:[%s5 + $0x1c8] sm:$0xff]
  %v575 = vld [vmem:[%s5 + $0x1d0] sm:$0xff]
  %v576 = vld [vmem:[%s5 + $0x1d8] sm:$0xff]
  %v577 = vld [vmem:[%s5 + $0x1e0] sm:$0xff]
  %v578 = vld [vmem:[%s5 + $0x1e8] sm:$0xff]
  %v579 = vld [vmem:[%s5 + $0x1f0] sm:$0xff]
  %v580 = vld [vmem:[%s5 + $0x1f8] sm:$0xff]
  %v581 = vld [vmem:[%s5 + $0x200] sm:$0xff]
  %v582 = vld [vmem:[%s5 + $0x208] sm:$0xff]
  %v583 = vld [vmem:[%s5 + $0x210] sm:$0xff]
  %v584 = vld [vmem:[%s5 + $0x218] sm:$0xff]
  %v585 = vld [vmem:[%s5 + $0x220] sm:$0xff]
  %v586 = vld [vmem:[%s5 + $0x228] sm:$0xff]
  %v587 = vld [vmem:[%s5 + $0x230] sm:$0xff]
  %v588 = vld [vmem:[%s5 + $0x238] sm:$0xff]
  %v589 = vld [vmem:[%s5 + $0x240] sm:$0xff]
  %v590 = vld [vmem:[%s5 + $0x248] sm:$0xff]
  %v591 = vld [vmem:[%s5 + $0x250] sm:$0xff]
  %v592 = vld [vmem:[%s5 + $0x258] sm:$0xff]
  %v593 = vld [vmem:[%s5 + $0x260] sm:$0xff]
  %v594 = vld [vmem:[%s5 + $0x268] sm:$0xff]
  %v595 = vld [vmem:[%s5 + $0x270] sm:$0xff]
  %v596 = vld [vmem:[%s5 + $0x278] sm:$0xff]
  %v597 = vld [vmem:[%s5 + $0x280] sm:$0xff]
  %v598 = vld [vmem:[%s5 + $0x288] sm:$0xff]
  %v599 = vld [vmem:[%s5 + $0x290] sm:$0xff]
  %v600 = vld [vmem:[%s5 + $0x298] sm:$0xff]
  %v601 = vld [vmem:[%s5 + $0x2a0] sm:$0xff]
  %v602 = vld [vmem:[%s5 + $0x2a8] sm:$0xff]
  %v603 = vld [vmem:[%s5 + $0x2b0] sm:$0xff]
  %v604 = vld [vmem:[%s5 + $0x2b8] sm:$0xff]
  %v605 = vld [vmem:[%s5 + $0x2c0] sm:$0xff]
  %v606 = vld [vmem:[%s5 + $0x2c8] sm:$0xff]
  %v607 = vld [vmem:[%s5 + $0x2d0] sm:$0xff]
  %v608 = vld [vmem:[%s5 + $0x2d8] sm:$0xff]
  %v609 = vld [vmem:[%s5 + $0x2e0] sm:$0xff]
  %v610 = vld [vmem:[%s5 + $0x2e8] sm:$0xff]
  %v611 = vld [vmem:[%s5 + $0x2f0] sm:$0xff]
  %v612 = vld [vmem:[%s5 + $0x2f8] sm:$0xff]
  %v613 = vld [vmem:[%s5 + $0x300] sm:$0xff]
  %v614 = vld [vmem:[%s5 + $0x308] sm:$0xff]
  %v615 = vld [vmem:[%s5 + $0x310] sm:$0xff]
  %v616 = vld [vmem:[%s5 + $0x318] sm:$0xff]
  %v617 = vld [vmem:[%s5 + $0x320] sm:$0xff]
  %v618 = vld [vmem:[%s5 + $0x328] sm:$0xff]
  %v619 = vld [vmem:[%s5 + $0x330] sm:$0xff]
  %v620 = vld [vmem:[%s5 + $0x338] sm:$0xff]
  %v621 = vld [vmem:[%s5 + $0x340] sm:$0xff]
  %v622 = vld [vmem:[%s5 + $0x348] sm:$0xff]
  %v623 = vld [vmem:[%s5 + $0x350] sm:$0xff]
  %v624 = vld [vmem:[%s5 + $0x358] sm:$0xff]
  %v625 = vld [vmem:[%s5 + $0x360] sm:$0xff]
  %v626 = vld [vmem:[%s5 + $0x368] sm:$0xff]
  %v627 = vld [vmem:[%s5 + $0x370] sm:$0xff]
  %v628 = vld [vmem:[%s5 + $0x378] sm:$0xff]
  %v629 = vld [vmem:[%s6] sm:$0x7f]
  %v631 = vlaneseq
  %v632 = vshrl.u32 %v631, 7
  %v633 = vsub.s32 0, %v632
  %v634 = vrot.slane %v629, %v633
  %v635 = vlaneseq
  %v636 = vshrl.u32 %v635, 7
  %v637 = vsub.s32 1, %v636
  %v638 = vrot.slane %v629, %v637
  %v639 = vlaneseq
  %v640 = vshrl.u32 %v639, 7
  %v641 = vsub.s32 2, %v640
  %v642 = vrot.slane %v629, %v641
  %v643 = vlaneseq
  %v644 = vshrl.u32 %v643, 7
  %v645 = vsub.s32 3, %v644
  %v646 = vrot.slane %v629, %v645
  %v647 = vlaneseq
  %v648 = vshrl.u32 %v647, 7
  %v649 = vsub.s32 4, %v648
  %v650 = vrot.slane %v629, %v649
  %v651 = vlaneseq
  %v652 = vshrl.u32 %v651, 7
  %v653 = vsub.s32 5, %v652
  %v654 = vrot.slane %v629, %v653
  %v655 = vlaneseq
  %v656 = vshrl.u32 %v655, 7
  %v657 = vsub.s32 6, %v656
  %v658 = vrot.slane %v629, %v657
  %666 = vmatprep.subr.mxu0 %v518
  %667 = vmatpush1.msra.mxu0 %v517
  %668 = vmatprep.subr.mxu0 %v525
  %669 = vmatpush1.msra.mxu0 %v524
  %670 = vmatprep.subr.mxu0 %v532
  %671 = vmatpush1.msra.mxu0 %v531
  %672 = vmatprep.subr.mxu0 %v539
  %673 = vmatpush1.msra.mxu0 %v538
  %674 = vmatprep.subr.mxu0 %v546
  %675 = vmatpush1.msra.mxu0 %v545
  %676 = vmatprep.subr.mxu0 %v553
  %677 = vmatpush1.msra.mxu0 %v552
  %678 = vmatprep.subr.mxu0 %v560
  %679 = vmatpush1.msra.mxu0 %v559
  %680 = vmatprep.subr.mxu0 %v567
  %681 = vmatpush1.msra.mxu0 %v566
  %682 = vmatprep.subr.mxu0 %v574
  %683 = vmatpush1.msra.mxu0 %v573
  %684 = vmatprep.subr.mxu0 %v581
  %685 = vmatpush1.msra.mxu0 %v580
  %686 = vmatprep.subr.mxu0 %v588
  %687 = vmatpush1.msra.mxu0 %v587
  %688 = vmatprep.subr.mxu0 %v595
  %689 = vmatpush1.msra.mxu0 %v594
  %690 = vmatprep.subr.mxu0 %v602
  %691 = vmatpush1.msra.mxu0 %v601
  %692 = vmatprep.subr.mxu0 %v609
  %693 = vmatpush1.msra.mxu0 %v608
  %694 = vmatprep.subr.mxu0 %v616
  %695 = vmatpush1.msra.mxu0 %v615
  %696 = vmatprep.subr.mxu0 %v623
  %697 = vmatpush1.msra.mxu0 %v622
  %698 = vmatprep.subr.mxu0 0.0
  %699 = vmatpush1.msra.mxu0 0.0
  %700 = vmatprep.subr.mxu0 0.0
  %701 = vmatpush1.msra.mxu0 0.0
  %702 = vmatprep.subr.mxu0 0.0
  %703 = vmatpush1.msra.mxu0 0.0
  %704 = vmatprep.subr.mxu0 0.0
  %705 = vmatpush1.msra.mxu0 0.0
  %706 = vmatprep.subr.mxu0 0.0
  %707 = vmatpush1.msra.mxu0 0.0
  %708 = vmatprep.subr.mxu0 0.0
  %709 = vmatpush1.msra.mxu0 0.0
  %710 = vmatprep.subr.mxu0 0.0
  %711 = vmatpush1.msra.mxu0 0.0
  %712 = vmatprep.subr.mxu0 0.0
  %713 = vmatpush1.msra.mxu0 0.0
  %714 = vmatprep.subr.mxu0 0.0
  %715 = vmatpush1.msra.mxu0 0.0
  %716 = vmatprep.subr.mxu0 0.0
  %717 = vmatpush1.msra.mxu0 0.0
  %718 = vmatprep.subr.mxu0 0.0
  %719 = vmatpush1.msra.mxu0 0.0
  %720 = vmatprep.subr.mxu0 0.0
  %721 = vmatpush1.msra.mxu0 0.0
  %722 = vmatprep.subr.mxu0 0.0
  %723 = vmatpush1.msra.mxu0 0.0
  %724 = vmatprep.subr.mxu0 0.0
  %725 = vmatpush1.msra.mxu0 0.0
  %726 = vmatprep.subr.mxu0 0.0
  %727 = vmatpush1.msra.mxu0 0.0
  %728 = vmatprep.subr.mxu0 0.0
  %729 = vmatpush1.msra.mxu0 0.0
  %730 = vmatprep.mubr.f32.mxu0 0.0
  %731 = vmatmul.mubr.f32.gmra.mrb[0].mxu0 %v516
  %v732 = vpop.f32.mrb[0].mxu0
  %v733 = vadd.f32 %v634, %v732
  %v734 = vpop.f32.mrb[0].mxu0
  %v735 = vadd.f32 %v638, %v734
  %736 = vdwg.mxu0
  %737 = vmatprep.subr.mxu0 %v520
  %738 = vmatpush1.msra.mxu0 %v519
  %739 = vmatprep.subr.mxu0 %v527
  %740 = vmatpush1.msra.mxu0 %v526
  %741 = vmatprep.subr.mxu0 %v534
  %742 = vmatpush1.msra.mxu0 %v533
  %743 = vmatprep.subr.mxu0 %v541
  %744 = vmatpush1.msra.mxu0 %v540
  %745 = vmatprep.subr.mxu0 %v548
  %746 = vmatpush1.msra.mxu0 %v547
  %747 = vmatprep.subr.mxu0 %v555
  %748 = vmatpush1.msra.mxu0 %v554
  %749 = vmatprep.subr.mxu0 %v562
  %750 = vmatpush1.msra.mxu0 %v561
  %751 = vmatprep.subr.mxu0 %v569
  %752 = vmatpush1.msra.mxu0 %v568
  %753 = vmatprep.subr.mxu0 %v576
  %754 = vmatpush1.msra.mxu0 %v575
  %755 = vmatprep.subr.mxu0 %v583
  %756 = vmatpush1.msra.mxu0 %v582
  %757 = vmatprep.subr.mxu0 %v590
  %758 = vmatpush1.msra.mxu0 %v589
  %759 = vmatprep.subr.mxu0 %v597
  %760 = vmatpush1.msra.mxu0 %v596
  %761 = vmatprep.subr.mxu0 %v604
  %762 = vmatpush1.msra.mxu0 %v603
  %763 = vmatprep.subr.mxu0 %v611
  %764 = vmatpush1.msra.mxu0 %v610
  %765 = vmatprep.subr.mxu0 %v618
  %766 = vmatpush1.msra.mxu0 %v617
  %767 = vmatprep.subr.mxu0 %v625
  %768 = vmatpush1.msra.mxu0 %v624
  %769 = vmatprep.subr.mxu0 0.0
  %770 = vmatpush1.msra.mxu0 0.0
  %771 = vmatprep.subr.mxu0 0.0
  %772 = vmatpush1.msra.mxu0 0.0
  %773 = vmatprep.subr.mxu0 0.0
  %774 = vmatpush1.msra.mxu0 0.0
  %775 = vmatprep.subr.mxu0 0.0
  %776 = vmatpush1.msra.mxu0 0.0
  %777 = vmatprep.subr.mxu0 0.0
  %778 = vmatpush1.msra.mxu0 0.0
  %779 = vmatprep.subr.mxu0 0.0
  %780 = vmatpush1.msra.mxu0 0.0
  %781 = vmatprep.subr.mxu0 0.0
  %782 = vmatpush1.msra.mxu0 0.0
  %783 = vmatprep.subr.mxu0 0.0
  %784 = vmatpush1.msra.mxu0 0.0
  %785 = vmatprep.subr.mxu0 0.0
  %786 = vmatpush1.msra.mxu0 0.0
  %787 = vmatprep.subr.mxu0 0.0
  %788 = vmatpush1.msra.mxu0 0.0
  %789 = vmatprep.subr.mxu0 0.0
  %790 = vmatpush1.msra.mxu0 0.0
  %791 = vmatprep.subr.mxu0 0.0
  %792 = vmatpush1.msra.mxu0 0.0
  %793 = vmatprep.subr.mxu0 0.0
  %794 = vmatpush1.msra.mxu0 0.0
  %795 = vmatprep.subr.mxu0 0.0
  %796 = vmatpush1.msra.mxu0 0.0
  %797 = vmatprep.subr.mxu0 0.0
  %798 = vmatpush1.msra.mxu0 0.0
  %799 = vmatprep.subr.mxu0 0.0
  %800 = vmatpush1.msra.mxu0 0.0
  %801 = vmatprep.mubr.f32.mxu0 0.0
  %802 = vmatmul.mubr.f32.gmra.mrb[0].mxu0 %v516
  %v803 = vpop.f32.mrb[0].mxu0
  %v804 = vadd.f32 %v642, %v803
  %v805 = vpop.f32.mrb[0].mxu0
  %v806 = vadd.f32 %v646, %v805
  %807 = vdwg.mxu0
  %808 = vmatprep.subr.mxu0 %v522
  %809 = vmatpush1.msra.mxu0 %v521
  %810 = vmatprep.subr.mxu0 %v529
  %811 = vmatpush1.msra.mxu0 %v528
  %812 = vmatprep.subr.mxu0 %v536
  %813 = vmatpush1.msra.mxu0 %v535
  %814 = vmatprep.subr.mxu0 %v543
  %815 = vmatpush1.msra.mxu0 %v542
  %816 = vmatprep.subr.mxu0 %v550
  %817 = vmatpush1.msra.mxu0 %v549
  %818 = vmatprep.subr.mxu0 %v557
  %819 = vmatpush1.msra.mxu0 %v556
  %820 = vmatprep.subr.mxu0 %v564
  %821 = vmatpush1.msra.mxu0 %v563
  %822 = vmatprep.subr.mxu0 %v571
  %823 = vmatpush1.msra.mxu0 %v570
  %824 = vmatprep.subr.mxu0 %v578
  %825 = vmatpush1.msra.mxu0 %v577
  %826 = vmatprep.subr.mxu0 %v585
  %827 = vmatpush1.msra.mxu0 %v584
  %828 = vmatprep.subr.mxu0 %v592
  %829 = vmatpush1.msra.mxu0 %v591
  %830 = vmatprep.subr.mxu0 %v599
  %831 = vmatpush1.msra.mxu0 %v598
  %832 = vmatprep.subr.mxu0 %v606
  %833 = vmatpush1.msra.mxu0 %v605
  %834 = vmatprep.subr.mxu0 %v613
  %835 = vmatpush1.msra.mxu0 %v612
  %836 = vmatprep.subr.mxu0 %v620
  %837 = vmatpush1.msra.mxu0 %v619
  %838 = vmatprep.subr.mxu0 %v627
  %839 = vmatpush1.msra.mxu0 %v626
  %840 = vmatprep.subr.mxu0 0.0
  %841 = vmatpush1.msra.mxu0 0.0
  %842 = vmatprep.subr.mxu0 0.0
  %843 = vmatpush1.msra.mxu0 0.0
  %844 = vmatprep.subr.mxu0 0.0
  %845 = vmatpush1.msra.mxu0 0.0
  %846 = vmatprep.subr.mxu0 0.0
  %847 = vmatpush1.msra.mxu0 0.0
  %848 = vmatprep.subr.mxu0 0.0
  %849 = vmatpush1.msra.mxu0 0.0
  %850 = vmatprep.subr.mxu0 0.0
  %851 = vmatpush1.msra.mxu0 0.0
  %852 = vmatprep.subr.mxu0 0.0
  %853 = vmatpush1.msra.mxu0 0.0
  %854 = vmatprep.subr.mxu0 0.0
  %855 = vmatpush1.msra.mxu0 0.0
  %856 = vmatprep.subr.mxu0 0.0
  %857 = vmatpush1.msra.mxu0 0.0
  %858 = vmatprep.subr.mxu0 0.0
  %859 = vmatpush1.msra.mxu0 0.0
  %860 = vmatprep.subr.mxu0 0.0
  %861 = vmatpush1.msra.mxu0 0.0
  %862 = vmatprep.subr.mxu0 0.0
  %863 = vmatpush1.msra.mxu0 0.0
  %864 = vmatprep.subr.mxu0 0.0
  %865 = vmatpush1.msra.mxu0 0.0
  %866 = vmatprep.subr.mxu0 0.0
  %867 = vmatpush1.msra.mxu0 0.0
  %868 = vmatprep.subr.mxu0 0.0
  %869 = vmatpush1.msra.mxu0 0.0
  %870 = vmatprep.subr.mxu0 0.0
  %871 = vmatpush1.msra.mxu0 0.0
  %872 = vmatprep.mubr.f32.mxu0 0.0
  %873 = vmatmul.mubr.f32.gmra.mrb[0].mxu0 %v516
  %v874 = vpop.f32.mrb[0].mxu0
  %v875 = vadd.f32 %v650, %v874
  %v876 = vpop.f32.mrb[0].mxu0
  %v877 = vadd.f32 %v654, %v876
  %878 = vdwg.mxu0
  %879 = vmatprep.subr.mxu0 0.0
  %880 = vmatpush1.msra.mxu0 %v523
  %881 = vmatprep.subr.mxu0 0.0
  %882 = vmatpush1.msra.mxu0 %v530
  %883 = vmatprep.subr.mxu0 0.0
  %884 = vmatpush1.msra.mxu0 %v537
  %885 = vmatprep.subr.mxu0 0.0
  %886 = vmatpush1.msra.mxu0 %v544
  %887 = vmatprep.subr.mxu0 0.0
  %888 = vmatpush1.msra.mxu0 %v551
  %889 = vmatprep.subr.mxu0 0.0
  %890 = vmatpush1.msra.mxu0 %v558
  %891 = vmatprep.subr.mxu0 0.0
  %892 = vmatpush1.msra.mxu0 %v565
  %893 = vmatprep.subr.mxu0 0.0
  %894 = vmatpush1.msra.mxu0 %v572
  %895 = vmatprep.subr.mxu0 0.0
  %896 = vmatpush1.msra.mxu0 %v579
  %897 = vmatprep.subr.mxu0 0.0
  %898 = vmatpush1.msra.mxu0 %v586
  %899 = vmatprep.subr.mxu0 0.0
  %900 = vmatpush1.msra.mxu0 %v593
  %901 = vmatprep.subr.mxu0 0.0
  %902 = vmatpush1.msra.mxu0 %v600
  %903 = vmatprep.subr.mxu0 0.0
  %904 = vmatpush1.msra.mxu0 %v607
  %905 = vmatprep.subr.mxu0 0.0
  %906 = vmatpush1.msra.mxu0 %v614
  %907 = vmatprep.subr.mxu0 0.0
  %908 = vmatpush1.msra.mxu0 %v621
  %909 = vmatprep.subr.mxu0 0.0
  %910 = vmatpush1.msra.mxu0 %v628
  %911 = vmatprep.subr.mxu0 0.0
  %912 = vmatpush1.msra.mxu0 0.0
  %913 = vmatprep.subr.mxu0 0.0
  %914 = vmatpush1.msra.mxu0 0.0
  %915 = vmatprep.subr.mxu0 0.0
  %916 = vmatpush1.msra.mxu0 0.0
  %917 = vmatprep.subr.mxu0 0.0
  %918 = vmatpush1.msra.mxu0 0.0
  %919 = vmatprep.subr.mxu0 0.0
  %920 = vmatpush1.msra.mxu0 0.0
  %921 = vmatprep.subr.mxu0 0.0
  %922 = vmatpush1.msra.mxu0 0.0
  %923 = vmatprep.subr.mxu0 0.0
  %924 = vmatpush1.msra.mxu0 0.0
  %925 = vmatprep.subr.mxu0 0.0
  %926 = vmatpush1.msra.mxu0 0.0
  %927 = vmatprep.subr.mxu0 0.0
  %928 = vmatpush1.msra.mxu0 0.0
  %929 = vmatprep.subr.mxu0 0.0
  %930 = vmatpush1.msra.mxu0 0.0
  %931 = vmatprep.subr.mxu0 0.0
  %932 = vmatpush1.msra.mxu0 0.0
  %933 = vmatprep.subr.mxu0 0.0
  %934 = vmatpush1.msra.mxu0 0.0
  %935 = vmatprep.subr.mxu0 0.0
  %936 = vmatpush1.msra.mxu0 0.0
  %937 = vmatprep.subr.mxu0 0.0
  %938 = vmatpush1.msra.mxu0 0.0
  %939 = vmatprep.subr.mxu0 0.0
  %940 = vmatpush1.msra.mxu0 0.0
  %941 = vmatprep.subr.mxu0 0.0
  %942 = vmatpush1.msra.mxu0 0.0
  %943 = vmatprep.mubr.f32.mxu0 0.0
  %944 = vmatmul.mubr.f32.gmra.mrb[0].mxu0 %v516
  %v945 = vpop.f32.mrb[0].mxu0
  %v946 = vadd.f32 %v658, %v945
  %v947 = vpop.f32.mrb[0].mxu0
  %948 = vdwg.mxu0
  %v949 = vxor.u32 %v733, 2147483648
  %v950 = vxor.u32 %v735, 2147483648
  %v951 = vxor.u32 %v804, 2147483648
  %v952 = vxor.u32 %v806, 2147483648
  %v953 = vxor.u32 %v875, 2147483648
  %v954 = vxor.u32 %v877, 2147483648
  %v955 = vxor.u32 %v946, 2147483648
  %v956 = vmul.f32 %v949, 1.442695
  %v957 = vpow.pop %v956
  %v958 = vmul.f32 %v950, 1.442695
  %v959 = vpow.pop %v958
  %v960 = vmul.f32 %v951, 1.442695
  %v961 = vpow.pop %v960
  %v962 = vmul.f32 %v952, 1.442695
  %v963 = vpow.pop %v962
  %v964 = vmul.f32 %v953, 1.442695
  %v965 = vpow.pop %v964
  %v966 = vmul.f32 %v954, 1.442695
  %v967 = vpow.pop %v966
  %v968 = vmul.f32 %v955, 1.442695
  %v969 = vpow.pop %v968
  %v970 = vadd.f32 %v957, 1.0
  %v971 = vadd.f32 %v959, 1.0
  %v972 = vadd.f32 %v961, 1.0
  %v973 = vadd.f32 %v963, 1.0
  %v974 = vadd.f32 %v965, 1.0
  %v975 = vadd.f32 %v967, 1.0
  %v976 = vadd.f32 %v969, 1.0
  %v977 = vrcp.pop %v970
  %v978 = vmul.f32 1.0, %v977
  %v979 = vrcp.pop %v971
  %v980 = vmul.f32 1.0, %v979
  %v981 = vrcp.pop %v972
  %v982 = vmul.f32 1.0, %v981
  %v983 = vrcp.pop %v973
  %v984 = vmul.f32 1.0, %v983
  %v985 = vrcp.pop %v974
  %v986 = vmul.f32 1.0, %v985
  %v987 = vrcp.pop %v975
  %v988 = vmul.f32 1.0, %v987
  %v989 = vrcp.pop %v976
  %v990 = vmul.f32 1.0, %v989
  %991 = vst [vmem:[%s7] sm:$0xff] %v978
  %992 = vst [vmem:[%s7 + $0x8] sm:$0xff] %v980
  %993 = vst [vmem:[%s7 + $0x10] sm:$0xff] %v982
  %994 = vst [vmem:[%s7 + $0x18] sm:$0xff] %v984
  %995 = vst [vmem:[%s7 + $0x20] sm:$0xff] %v986
  %996 = vst [vmem:[%s7 + $0x28] sm:$0xff] %v988
  %997 = vst.msk [vmem:[%s7 + $0x30] sm:$0xff] %vm138, %v990
  // Predicated region
  $region30: #{autoencoder_forward.1} parent=0 // pred_check
    _
  $region31: #{autoencoder_forward.1} parent=0 // pred_check_branch
    %999 = sbr.rel (0) target = $region33
  $region32: #{autoencoder_forward.1} parent=0 // pred_region
    _
  $region33: #{autoencoder_forward.1} parent=0 // pred_fallthru
    _
  // Predicated region
  $region34: #{autoencoder_forward.1} parent=0 // pred_check
    _
  $region35: #{autoencoder_forward.1} parent=0 // pred_check_branch
    %1001 = sbr.rel (0) target = $region37
  $region36: #{autoencoder_forward.1} parent=0 // pred_region
    _
  $region37: #{autoencoder_forward.1} parent=0 // pred_fallthru
    _

</llo_original>
